<compile_context>
chip_gen: v5e
topology: v5e:2x2
jax: 0.10.0
libtpu: 0.0.40
codegen_flags: <defaults>
</compile_context>

<pallas_src>
import jax
import jax.numpy as jnp
import numpy as np
from jax.experimental import pallas as pl
from jax.experimental.pallas import tpu as pltpu


def _tree_prod_rows(a):
    """(R, C) -> (1, C): product over rows (sublanes) via binary halving tree."""
    while a.shape[0] > 1:
        r = a.shape[0]
        half = r // 2
        p = a[0:half, :] * a[half : 2 * half, :]
        if r % 2:  # odd leftover row: fold into the first row (not hit at R=8)
            p = jnp.concatenate([p[0:1, :] * a[r - 1 : r, :], p[1:, :]], axis=0)
        a = p
    return a


def _tree_prod_cols(a):
    """(R, C) -> (R, 1): product over columns (lanes) via binary halving tree."""
    while a.shape[1] > 1:
        c = a.shape[1]
        half = c // 2
        p = a[:, 0:half] * a[:, half : 2 * half]
        if c % 2:  # odd leftover column: fold into the first column (not hit at C=32)
            p = jnp.concatenate([p[:, 0:1] * a[:, c - 1 : c], p[:, 1:]], axis=1)
        a = p
    return a


def cnf_kernel(x_ref, w_or_ref, w_and_t_ref, out_ref):
    # x_ref:       (I, 1)  input literal column
    # w_or_ref:    (I, H)  layer_or_weights, natural layout
    # w_and_t_ref: (O, H)  layer_and_weights pre-transposed at parameter setup
    # out_ref:     (O, 1)
    w_or = jnp.clip(w_or_ref[...], 0.0, 1.0)        # clamp_(0, 1)
    w_and_t = jnp.clip(w_and_t_ref[...], 0.0, 1.0)  # clamp_(0, 1)
    x = x_ref[...]                                  # (I, 1)

    # gated soft-OR: 1 - prod_i (1 - w*x); tree-reduce over sublanes (depth log2 I)
    o = 1.0 - w_or * x                              # (I, H), x broadcast over lanes
    or_res = 1.0 - _tree_prod_rows(o)               # (1, H)

    # gated soft-AND: prod_h (w*or + (1 - w)); tree-reduce over lanes (depth log2 H)
    g2 = w_and_t * or_res + (1.0 - w_and_t)         # (O, H), or_res broadcast over sublanes
    out_ref[...] = _tree_prod_cols(g2)              # (O, 1)


def prepare_and_weights(layer_and_weights):
    """One-time parameter-setup transpose: (H, O) -> (O, H).

    Done once outside the jitted forward so no per-call transpose HLO is emitted.
    """
    return jnp.asarray(layer_and_weights, jnp.float32).T


@jax.jit
def cnf_network_forward(x, layer_or_weights, layer_and_weights_t):
    """x: (I, 1), layer_or_weights: (I, H), layer_and_weights_t: (O, H) -> (O, 1)."""
    in_size, one = x.shape
    assert one == 1
    in_size2, hidden = layer_or_weights.shape
    out_size, hidden2 = layer_and_weights_t.shape
    assert in_size == in_size2 and hidden == hidden2

    x32 = x.astype(jnp.float32)
    w_or32 = layer_or_weights.astype(jnp.float32)
    w_and_t32 = layer_and_weights_t.astype(jnp.float32)

    vmem = pltpu.MemorySpace.VMEM
    out = pl.pallas_call(
        cnf_kernel,
        out_shape=jax.ShapeDtypeStruct((out_size, 1), jnp.float32),
        in_specs=[
            pl.BlockSpec(memory_space=vmem),
            pl.BlockSpec(memory_space=vmem),
            pl.BlockSpec(memory_space=vmem),
        ],
        out_specs=pl.BlockSpec(memory_space=vmem),
    )(x32, w_or32, w_and_t32)

    return out  # (O, 1), matches torch outs shape


def cnf_network_reference(x, w_or, w_and):
    """Pure-JAX reference mirroring the PyTorch forward (w_and in natural (H, O))."""
    w_or = jnp.clip(w_or, 0.0, 1.0)
    w_and = jnp.clip(w_and, 0.0, 1.0)
    gated = w_or * x                                      # (I, H)
    o = 1.0 - gated
    or_res = 1.0 - jnp.prod(o, axis=0)                    # (H,)
    or_res = or_res[:, None]                              # (H, 1)
    g2 = w_and * or_res + (1.0 - w_and)                   # (H, O)
    return jnp.prod(g2, axis=0)[:, None]                  # (O, 1)


if __name__ == "__main__":
    input_size, hidden_size, output_size = 8, 32, 8

    key = jax.random.PRNGKey(0)
    k_or, k_and, k_x = jax.random.split(key, 3)

    # Parameters: uniform(0, 1), matching torch.Tensor(...).uniform_(0.0, 1.0)
    layer_or_weights = jax.random.uniform(
        k_or, (input_size, hidden_size), dtype=jnp.float32, minval=0.0, maxval=1.0
    )
    layer_and_weights = jax.random.uniform(
        k_and, (hidden_size, output_size), dtype=jnp.float32, minval=0.0, maxval=1.0
    )
    # Input literal values in [0, 1], column vector (input_size, 1)
    x = jax.random.uniform(
        k_x, (input_size, 1), dtype=jnp.float32, minval=0.0, maxval=1.0
    )

    # One-time parameter setup (outside the jitted per-call forward).
    layer_and_weights_t = prepare_and_weights(layer_and_weights)   # (O, H)

    out = cnf_network_forward(x, layer_or_weights, layer_and_weights_t)
    out = jax.block_until_ready(out)

    ref = cnf_network_reference(x, layer_or_weights, layer_and_weights)
    np.testing.assert_allclose(np.asarray(out), np.asarray(ref), rtol=1e-5, atol=1e-6)
    assert out.shape == (output_size, 1)

    print("KERNEL_OK")
</pallas_src>

<mosaic_0001>
module attributes {stable_mosaic.version = 11 : i64} {
  func.func @cnf_kernel(%arg0: memref<8x1xf32, #tpu.memory_space<vmem>>, %arg1: memref<8x32xf32, #tpu.memory_space<vmem>>, %arg2: memref<8x32xf32, #tpu.memory_space<vmem>>, %arg3: memref<8x1xf32, #tpu.memory_space<vmem>>) attributes {dimension_semantics = [], scalar_prefetch = 0 : i64, scratch_operands = 0 : i64, tpu.core_type = #tpu.core_type<tc>} {
    %c0 = arith.constant 0 : index
    %c0_0 = arith.constant 0 : index
    %0 = vector.load %arg1[%c0, %c0_0] : memref<8x32xf32, #tpu.memory_space<vmem>>, vector<8x32xf32>
    %cst = arith.constant 0.000000e+00 : f32
    %cst_1 = arith.constant 1.000000e+00 : f32
    %1 = vector.broadcast %cst : f32 to vector<8x32xf32>
    %2 = arith.maximumf %1, %0 : vector<8x32xf32>
    %3 = vector.broadcast %cst_1 : f32 to vector<8x32xf32>
    %4 = arith.minimumf %3, %2 : vector<8x32xf32>
    %c0_2 = arith.constant 0 : index
    %c0_3 = arith.constant 0 : index
    %5 = vector.load %arg2[%c0_2, %c0_3] : memref<8x32xf32, #tpu.memory_space<vmem>>, vector<8x32xf32>
    %cst_4 = arith.constant 0.000000e+00 : f32
    %cst_5 = arith.constant 1.000000e+00 : f32
    %6 = vector.broadcast %cst_4 : f32 to vector<8x32xf32>
    %7 = arith.maximumf %6, %5 : vector<8x32xf32>
    %8 = vector.broadcast %cst_5 : f32 to vector<8x32xf32>
    %9 = arith.minimumf %8, %7 : vector<8x32xf32>
    %c0_6 = arith.constant 0 : index
    %c0_7 = arith.constant 0 : index
    %10 = vector.load %arg0[%c0_6, %c0_7] : memref<8x1xf32, #tpu.memory_space<vmem>>, vector<8x1xf32>
    %11 = vector.broadcast %10 : vector<8x1xf32> to vector<8x32xf32>
    %12 = arith.mulf %4, %11 : vector<8x32xf32>
    %cst_8 = arith.constant 1.000000e+00 : f32
    %13 = vector.broadcast %cst_8 : f32 to vector<8x32xf32>
    %14 = arith.subf %13, %12 : vector<8x32xf32>
    %15 = vector.extract_strided_slice %14 {offsets = [0, 0], sizes = [4, 32], strides = [1, 1]} : vector<8x32xf32> to vector<4x32xf32>
    %16 = vector.extract_strided_slice %14 {offsets = [4, 0], sizes = [4, 32], strides = [1, 1]} : vector<8x32xf32> to vector<4x32xf32>
    %17 = arith.mulf %15, %16 : vector<4x32xf32>
    %18 = vector.extract_strided_slice %17 {offsets = [0, 0], sizes = [2, 32], strides = [1, 1]} : vector<4x32xf32> to vector<2x32xf32>
    %19 = vector.extract_strided_slice %17 {offsets = [2, 0], sizes = [2, 32], strides = [1, 1]} : vector<4x32xf32> to vector<2x32xf32>
    %20 = arith.mulf %18, %19 : vector<2x32xf32>
    %21 = vector.extract_strided_slice %20 {offsets = [0, 0], sizes = [1, 32], strides = [1, 1]} : vector<2x32xf32> to vector<1x32xf32>
    %22 = vector.extract_strided_slice %20 {offsets = [1, 0], sizes = [1, 32], strides = [1, 1]} : vector<2x32xf32> to vector<1x32xf32>
    %23 = arith.mulf %21, %22 : vector<1x32xf32>
    %cst_9 = arith.constant 1.000000e+00 : f32
    %24 = vector.broadcast %cst_9 : f32 to vector<1x32xf32>
    %25 = arith.subf %24, %23 : vector<1x32xf32>
    %26 = vector.broadcast %25 : vector<1x32xf32> to vector<8x32xf32>
    %27 = arith.mulf %9, %26 : vector<8x32xf32>
    %cst_10 = arith.constant 1.000000e+00 : f32
    %28 = vector.broadcast %cst_10 : f32 to vector<8x32xf32>
    %29 = arith.subf %28, %9 : vector<8x32xf32>
    %30 = arith.addf %27, %29 : vector<8x32xf32>
    %31 = vector.extract_strided_slice %30 {offsets = [0, 0], sizes = [8, 16], strides = [1, 1]} : vector<8x32xf32> to vector<8x16xf32>
    %32 = vector.extract_strided_slice %30 {offsets = [0, 16], sizes = [8, 16], strides = [1, 1]} : vector<8x32xf32> to vector<8x16xf32>
    %33 = arith.mulf %31, %32 : vector<8x16xf32>
    %34 = vector.extract_strided_slice %33 {offsets = [0, 0], sizes = [8, 8], strides = [1, 1]} : vector<8x16xf32> to vector<8x8xf32>
    %35 = vector.extract_strided_slice %33 {offsets = [0, 8], sizes = [8, 8], strides = [1, 1]} : vector<8x16xf32> to vector<8x8xf32>
    %36 = arith.mulf %34, %35 : vector<8x8xf32>
    %37 = vector.extract_strided_slice %36 {offsets = [0, 0], sizes = [8, 4], strides = [1, 1]} : vector<8x8xf32> to vector<8x4xf32>
    %38 = vector.extract_strided_slice %36 {offsets = [0, 4], sizes = [8, 4], strides = [1, 1]} : vector<8x8xf32> to vector<8x4xf32>
    %39 = arith.mulf %37, %38 : vector<8x4xf32>
    %40 = vector.extract_strided_slice %39 {offsets = [0, 0], sizes = [8, 2], strides = [1, 1]} : vector<8x4xf32> to vector<8x2xf32>
    %41 = vector.extract_strided_slice %39 {offsets = [0, 2], sizes = [8, 2], strides = [1, 1]} : vector<8x4xf32> to vector<8x2xf32>
    %42 = arith.mulf %40, %41 : vector<8x2xf32>
    %43 = vector.extract_strided_slice %42 {offsets = [0, 0], sizes = [8, 1], strides = [1, 1]} : vector<8x2xf32> to vector<8x1xf32>
    %44 = vector.extract_strided_slice %42 {offsets = [0, 1], sizes = [8, 1], strides = [1, 1]} : vector<8x2xf32> to vector<8x1xf32>
    %45 = arith.mulf %43, %44 : vector<8x1xf32>
    %c0_11 = arith.constant 0 : index
    %c0_12 = arith.constant 0 : index
    %46 = vector.load %arg3[%c0_11, %c0_12] : memref<8x1xf32, #tpu.memory_space<vmem>>, vector<8x1xf32>
    tpu.vector_store %arg3[%c0_11, %c0_12], %45 {strides = array<i32>} : memref<8x1xf32, #tpu.memory_space<vmem>>, vector<8x1xf32>,
    return
  }
}

</mosaic_0001>

<llo_original>
// kernel: cnf_network_forward.1
$region0: #{cnf_network_forward.1}
  #allocation0 [shape = 'u32[]', space=smem, size = 0x4, offset = 0x4, fixed_abs, tag = 'smem constant byte address 0x4 - core index']
  #allocation1 [shape = 'u32[72,128]{1,0:T(1,128)}', space=vmem, size = 0x9000, scoped, tag = 'internal scratch']
  %s0 = inlined_call_operand.vmem [shape: f32[8,1], index: 0, kind: input, shape index: {}]
  %s1 = inlined_call_operand.vmem [shape: f32[8,32], index: 1, kind: input, shape index: {}]
  %s2 = inlined_call_operand.hbm [shape: f32[8,32], index: 2, kind: input, shape index: {}]
  %s3 = inlined_call_operand.vmem [shape: f32[8,1], index: 3, kind: output, shape index: {}]
  %s4 = sld [smem:[#allocation0]]
  $region26: #{cnf_network_forward.1} parent=0
    _
  %s6 = ssub.s32 1, %s4
  %s7 = scalar_select 0, %s6, %s4
  $region1: #{cnf_network_forward.1} parent=0
    #allocation2 [shape = 'u8[4096]{0}', space=vmem, size = 0x1000, scoped, tag = 'input window, operand 2, single buffered']
    #allocation3 [shape = 's32[1]{0}', space=sflag, size = 0x4, scoped, tag = 'scoped memory for cnf_network_forward.1']
    %8 = vsyncpa [#allocation3], 0
    // Predicated region
    $region2: #{cnf_network_forward.1} parent=1 // pred_check
      _
    $region3: #{cnf_network_forward.1} parent=1 // pred_check_branch
      %10 = sbr.rel (0) target = $region5
    $region4: #{cnf_network_forward.1} parent=1 // pred_region
      _
    $region5: #{cnf_network_forward.1} parent=1 // pred_fallthru
      _
    // Predicated region
    $region6: #{cnf_network_forward.1} parent=1 // pred_check
      _
    $region7: #{cnf_network_forward.1} parent=1 // pred_check_branch
      %12 = sbr.rel (0) target = $region9
    $region8: #{cnf_network_forward.1} parent=1 // pred_region
      _
    $region9: #{cnf_network_forward.1} parent=1 // pred_fallthru
      _
    // Predicated region
    $region10: #{cnf_network_forward.1} parent=1 // pred_check
      _
    $region11: #{cnf_network_forward.1} parent=1 // pred_check_branch
      %14 = sbr.rel (0) target = $region13
    $region12: #{cnf_network_forward.1} parent=1 // pred_region
      %16 = vsyncadd [#allocation3], 0
      %s18 = sshll.u32 %s2, 4
      %s19 = int_to_ptr.hbm [resolvable:$true] %s18
      %s20 = sshll.u32 [#allocation2], 4
      %s21 = int_to_ptr.vmem [resolvable:$true] %s20
      %23 = dma.hbm_to_vmem [thread:$0]  %s19, 128, %s21, [#allocation3]
    $region13: #{cnf_network_forward.1} parent=1 // pred_fallthru
      _
    // Predicated region
    $region14: #{cnf_network_forward.1} parent=1 // pred_check
      _
    $region15: #{cnf_network_forward.1} parent=1 // pred_check_branch
      %25 = sbr.rel (0) target = $region17
    $region16: #{cnf_network_forward.1} parent=1 // pred_region
      %27 = dma.done [#allocation3], 128
    $region17: #{cnf_network_forward.1} parent=1 // pred_fallthru
      _
    %v28 = vld [vmem:[%s1] sm:$0xff]
    %v29 = vmax.f32 %v28, 0.0
    %v30 = vmin.f32 %v29, 1.0
    %v31 = vld [vmem:[#allocation2] sm:$0xff]
    %v32 = vmax.f32 %v31, 0.0
    %v33 = vmin.f32 %v32, 1.0
    %v34 = vld [vmem:[%s0] sm:$0xff]
    %36 = vset.pattern.permute.xlu0 0
    %37 = vperm.xlu0 %36, %v34
    %v38 = vpop.permute.xlu0 %37
    %v40 = vmul.f32 %v30, %v38
    %v41 = vsub.f32 1.0, %v40
    %v43 = vrot.slane %v41, 4
    %v45 = vmul.f32 %v41, %v43
    %v47 = vrot.slane %v45, 2
    %v49 = vmul.f32 %v45, %v47
    %v51 = vrot.slane %v49, 1
    %v53 = vmul.f32 %v49, %v51
    %v54 = vsub.f32 1.0, %v53
    %v55 = vperm.slane %v54, 0
    %v56 = vmul.f32 %v33, %v55
    %v57 = vsub.f32 1.0, %v33
    %v58 = vadd.f32 %v56, %v57
    %60 = vrot.lane.b32.xlu0 %v58, 112
    %v61 = vpop.permute.xlu0 %60
    %v63 = vmul.f32 %v58, %v61
    %65 = vrot.lane.b32.xlu0 %v63, 120
    %v66 = vpop.permute.xlu0 %65
    %v68 = vmul.f32 %v63, %v66
    %70 = vrot.lane.b32.xlu0 %v68, 124
    %v71 = vpop.permute.xlu0 %70
    %v73 = vmul.f32 %v68, %v71
    %75 = vrot.lane.b32.xlu0 %v73, 126
    %v76 = vpop.permute.xlu0 %75
    %v78 = vmul.f32 %v73, %v76
    %80 = vrot.lane.b32.xlu0 %v78, 127
    %v81 = vpop.permute.xlu0 %80
    %v83 = vmul.f32 %v78, %v81
    %vm84 = vcmask 7168
    %85 = vst.msk [vmem:[%s3] sm:$0xff] %vm84, %v83
    // Predicated region
    $region18: #{cnf_network_forward.1} parent=1 // pred_check
      _
    $region19: #{cnf_network_forward.1} parent=1 // pred_check_branch
      %87 = sbr.rel (0) target = $region21
    $region20: #{cnf_network_forward.1} parent=1 // pred_region
      _
    $region21: #{cnf_network_forward.1} parent=1 // pred_fallthru
      _
    // Predicated region
    $region22: #{cnf_network_forward.1} parent=1 // pred_check
      _
    $region23: #{cnf_network_forward.1} parent=1 // pred_check_branch
      %89 = sbr.rel (0) target = $region25
    $region24: #{cnf_network_forward.1} parent=1 // pred_region
      _
    $region25: #{cnf_network_forward.1} parent=1 // pred_fallthru
      _
    %90 = vsyncpa [#allocation3], 1

</llo_original>
